<compile_context>
chip_gen: v7x
topology: tpu7x:2x2x1
jax: 0.10.0
libtpu: 0.0.40
codegen_flags: <defaults>
</compile_context>

<pallas_src>
import math

import jax
import jax.numpy as jnp
from jax.experimental import pallas as pl
from jax.experimental.pallas import tpu as pltpu

GELU_C = math.sqrt(2.0 / math.pi)
LANES = 128          # vreg lane width (fast axis)
SUBLANES = 8         # vreg sublane count (slow axis)


def gelu_kernel(x_ref, o_ref):
    # Elementwise tanh-GELU on one lane-dense (tile_rows, 128) VMEM block.
    # Compute in f32: polynomial part on the VPU, tanh on the EUP (separate slot).
    x = x_ref[...].astype(jnp.float32)
    inner = GELU_C * (x + 0.044715 * (x * x * x))
    y = 0.5 * x * (1.0 + jnp.tanh(inner))
    o_ref[...] = y.astype(o_ref.dtype)


def pallas_gelu(x, *, max_tile_rows=2048):
    """tanh-GELU of an arbitrarily shaped array via a lane-dense Pallas kernel.

    The input is flattened, zero-padded to a multiple of (8, 128), and reshaped to
    a (rows, 128) slab so loads/stores are unmasked and full-lane.  Small inputs
    run as a single grid step; large inputs are tiled over rows with a "parallel"
    grid axis (megacore-friendly on v7x, VMEM-safe on all generations).
    """
    orig_shape = x.shape
    dtype = x.dtype
    n = x.size

    flat = x.reshape(-1)
    chunk = LANES * SUBLANES
    n_pad = pl.cdiv(n, chunk) * chunk
    if n_pad != n:
        flat = jnp.pad(flat, (0, n_pad - n))
    rows = n_pad // LANES                      # multiple of 8 by construction

    # Largest row-tile (multiple of 8) that divides `rows`, capped for VMEM.
    tile_rows = rows
    if tile_rows > max_tile_rows:
        tile_rows = max_tile_rows
        while rows % tile_rows:
            tile_rows -= SUBLANES

    x2 = flat.reshape(rows, LANES)
    grid = (rows // tile_rows,)

    out = pl.pallas_call(
        gelu_kernel,
        out_shape=jax.ShapeDtypeStruct((rows, LANES), dtype),
        grid_spec=pltpu.PrefetchScalarGridSpec(
            num_scalar_prefetch=0,
            grid=grid,
            in_specs=[pl.BlockSpec((tile_rows, LANES), lambda i: (i, 0))],
            out_specs=pl.BlockSpec((tile_rows, LANES), lambda i: (i, 0)),
        ),
        compiler_params=pltpu.CompilerParams(
            dimension_semantics=("parallel",),
        ),
        cost_estimate=pl.CostEstimate(
            flops=10 * n_pad,
            transcendentals=n_pad,
            bytes_accessed=2 * n_pad * x2.dtype.itemsize,
        ),
    )(x2)

    return out.reshape(-1)[:n].reshape(orig_shape)


# ---------------- pure-JAX reference (correctness check) ----------------
def reference_gelu(x):
    return 0.5 * x * (1.0 + jnp.tanh(GELU_C * (x + 0.044715 * jnp.power(x, 3))))


if __name__ == "__main__":
    key = jax.random.PRNGKey(0)
    # Small shape consistent with the module's typical use inside the FFN:
    # (batch=2, seq=8, hidden=32).
    x = jax.random.normal(key, (2, 8, 32), jnp.float32)

    out = jax.block_until_ready(pallas_gelu(x))

    ref = reference_gelu(x)
    assert out.shape == x.shape
    assert jnp.allclose(out, ref, rtol=1e-6, atol=1e-6), "mismatch vs pure-JAX reference"

    print("KERNEL_OK")
</pallas_src>

<mosaic_0001>
module attributes {stable_mosaic.version = 11 : i64} {
  func.func @gelu_kernel(%arg0: i32, %arg1: memref<8x128xf32, #tpu.memory_space<vmem>>, %arg2: memref<8x128xf32, #tpu.memory_space<vmem>>) attributes {dimension_semantics = [#tpu.dimension_semantics<parallel>], iteration_bounds = array<i64: 1>, scalar_prefetch = 0 : i64, scratch_operands = 0 : i64, tpu.core_type = #tpu.core_type<tc>, window_params = [{transform_indices = @transform_0, window_bounds = array<i64: 8, 128>}, {transform_indices = @transform_1, window_bounds = array<i64: 8, 128>}]} {
    %c0 = arith.constant 0 : index
    %c0_0 = arith.constant 0 : index
    %0 = vector.load %arg1[%c0, %c0_0] : memref<8x128xf32, #tpu.memory_space<vmem>>, vector<8x128xf32>
    %1 = arith.mulf %0, %0 : vector<8x128xf32>
    %2 = arith.mulf %1, %0 : vector<8x128xf32>
    %cst = arith.constant 4.471500e-02 : f32
    %3 = vector.broadcast %cst : f32 to vector<8x128xf32>
    %4 = arith.mulf %3, %2 : vector<8x128xf32>
    %5 = arith.addf %0, %4 : vector<8x128xf32>
    %cst_1 = arith.constant 0.797884583 : f32
    %6 = vector.broadcast %cst_1 : f32 to vector<8x128xf32>
    %7 = arith.mulf %6, %5 : vector<8x128xf32>
    %cst_2 = arith.constant 5.000000e-01 : f32
    %8 = vector.broadcast %cst_2 : f32 to vector<8x128xf32>
    %9 = arith.mulf %8, %0 : vector<8x128xf32>
    %10 = math.tanh %7 : vector<8x128xf32>
    %cst_3 = arith.constant 1.000000e+00 : f32
    %11 = vector.broadcast %cst_3 : f32 to vector<8x128xf32>
    %12 = arith.addf %11, %10 : vector<8x128xf32>
    %13 = arith.mulf %9, %12 : vector<8x128xf32>
    %c0_4 = arith.constant 0 : index
    %c0_5 = arith.constant 0 : index
    %14 = vector.load %arg2[%c0_4, %c0_5] : memref<8x128xf32, #tpu.memory_space<vmem>>, vector<8x128xf32>
    tpu.vector_store %arg2[%c0_4, %c0_5], %13 {strides = array<i32>} : memref<8x128xf32, #tpu.memory_space<vmem>>, vector<8x128xf32>,
    return
  }
  func.func @transform_0(%arg0: i32) -> (i32, i32) {
    %c0_i32 = arith.constant 0 : i32
    %c0_i32_0 = arith.constant 0 : i32
    return %arg0, %c0_i32 : i32, i32
  }
  func.func @transform_1(%arg0: i32) -> (i32, i32) {
    %c0_i32 = arith.constant 0 : i32
    %c0_i32_0 = arith.constant 0 : i32
    return %arg0, %c0_i32 : i32, i32
  }
}

</mosaic_0001>

<llo_original>
// kernel: tpu_custom_call.1
$region0: #{tpu_custom_call.1}
  #allocation0 [shape = 'u32[]', space=smem, size = 0x4, offset = 0x4, fixed_abs, tag = 'smem constant byte address 0x4 - core index']
  #allocation1 [shape = 'u32[144,128]{1,0:T(1,128)}', space=vmem, size = 0x12000, scoped, tag = 'internal scratch']
  %s0 = inlined_call_operand.hbm [shape: f32[8,128], index: 0, kind: input, shape index: {}]
  %s1 = inlined_call_operand.hbm [shape: f32[8,128], index: 1, kind: output, shape index: {}]
  %s2 = sld [smem:[#allocation0]]
  $region18: #{tpu_custom_call.1} parent=0
    _
  %s4 = ssub.s32 1, %s2
  %s5 = scalar_select 0, %s4, %s2
  $region1: #{tpu_custom_call.1} parent=0
    #allocation2 [shape = 'u8[4096]{0}', space=vmem, size = 0x1000, scoped, tag = 'input window, operand 0, single buffered']
    #allocation3 [shape = 's32[1]{0}', space=sflag, size = 0x4, scoped, tag = 'scoped memory for tpu_custom_call.1']
    #allocation4 [shape = 's32[1]{0}', space=sflag, size = 0x4, scoped, tag = 'scoped memory for tpu_custom_call.1']
    #allocation5 [shape = 'u8[4096]{0}', space=vmem, size = 0x1000, scoped, tag = 'output window, operand 0, single buffered']
    %6 = vsyncpa [#allocation3], 0
    %7 = vsyncpa [#allocation4], 0
    // Predicated region
    $region2: #{tpu_custom_call.1} parent=1 // pred_check
      _
    $region3: #{tpu_custom_call.1} parent=1 // pred_check_branch
      %9 = sbr.rel (0) target = $region5
    $region4: #{tpu_custom_call.1} parent=1 // pred_region
      %s11 = ssub.s32 128, 128
      %12 = vsyncadd [#allocation3], %s11
      %s14 = sshll.u32 [#allocation2], 4
      %s15 = int_to_ptr.vmem [resolvable:$true] %s14
      %17 = dma.hbm_to_vmem [thread:$0]  %s0, 128, %s15, [#allocation3]
    $region5: #{tpu_custom_call.1} parent=1 // pred_fallthru
      _
    // Predicated region
    $region6: #{tpu_custom_call.1} parent=1 // pred_check
      _
    $region7: #{tpu_custom_call.1} parent=1 // pred_check_branch
      %19 = sbr.rel (0) target = $region9
    $region8: #{tpu_custom_call.1} parent=1 // pred_region
      %20 = dma.done [#allocation3], 128
    $region9: #{tpu_custom_call.1} parent=1 // pred_fallthru
      _
    %v21 = vld [vmem:[#allocation2] sm:$0xff]
    %v22 = vmul.f32 %v21, %v21
    %v23 = vmul.f32 %v22, %v21
    %v24 = vmul.f32 %v23, 0.044715
    %v25 = vadd.f32 %v21, %v24
    %v26 = vmul.f32 %v25, 0.7978846
    %v27 = vmul.f32 %v21, 0.5
    %v28 = vtanh.pop %v26
    %v29 = vadd.f32 %v28, 1.0
    %v30 = vmul.f32 %v27, %v29
    %31 = vst [vmem:[#allocation5] sm:$0xff] %v30
    // Predicated region
    $region10: #{tpu_custom_call.1} parent=1 // pred_check
      _
    $region11: #{tpu_custom_call.1} parent=1 // pred_check_branch
      %33 = sbr.rel (0) target = $region13
    $region12: #{tpu_custom_call.1} parent=1 // pred_region
      %s35 = ssub.s32 128, 128
      %36 = vsyncadd [#allocation4], %s35
      %s38 = sshll.u32 [#allocation5], 4
      %s39 = int_to_ptr.vmem [resolvable:$true] %s38
      %41 = dma.vmem_to_hbm [thread:$0]  %s39, 128, %s1, [#allocation4]
    $region13: #{tpu_custom_call.1} parent=1 // pred_fallthru
      _
    // Predicated region
    $region14: #{tpu_custom_call.1} parent=1 // pred_check
      _
    $region15: #{tpu_custom_call.1} parent=1 // pred_check_branch
      %43 = sbr.rel (0) target = $region17
    $region16: #{tpu_custom_call.1} parent=1 // pred_region
      %44 = dma.done [#allocation4], 128
    $region17: #{tpu_custom_call.1} parent=1 // pred_fallthru
      _
    %45 = vsyncpa [#allocation3], 1
    %46 = vsyncpa [#allocation4], 1

</llo_original>
